<compile_context>
chip_gen: v6e
topology: v6e:2x2x1
jax: 0.10.0
libtpu: 0.0.40
codegen_flags: <defaults>
</compile_context>

<pallas_src>
import functools

import jax
import jax.numpy as jnp
from jax import lax
from jax.experimental import pallas as pl
from jax.experimental.pallas import tpu as pltpu


def _round_up(x, m):
    return ((x + m - 1) // m) * m


def _choose_tm(m_valid, k_pad, budget_bytes=8 * 1024 * 1024):
    """Pick the M tile so double-buffered bf16 patch tiles stay in a VMEM budget
    (conservative enough for v7x's 64 MiB VMEM / 32 MiB default scoped limit)."""
    cap = max(8, (budget_bytes // (2 * 2 * k_pad)) // 8 * 8)
    if m_valid <= min(1024, cap):
        return _round_up(m_valid, 8)          # single reduction step
    return min(512, cap)


# ----------------------------------------------------------------------------
# Pallas kernel 1: fused conv-as-matmul + bias + ReLU + global average pool
#   grid = (sample, m_tile); m axis is a reduction ("arbitrary") with a VMEM
#   (1, F_pad) accumulator; output is the pooled (S, 1, F_pad) feature vector.
# ----------------------------------------------------------------------------
def _conv_pool_kernel(p_ref, w_ref, b_ref, o_ref, acc_ref, *, m_valid, tm):
    m = pl.program_id(1)

    @pl.when(m == 0)
    def _init():
        acc_ref[...] = jnp.zeros_like(acc_ref)

    # (TM, K_pad) bf16 @ (K_pad, F_pad) bf16 -> f32 on the MXU
    acts = jnp.dot(p_ref[0], w_ref[...], preferred_element_type=jnp.float32)
    acts = jnp.maximum(acts + b_ref[...], 0.0)          # bias + ReLU (per pixel)

    # mask zero-padded pixel rows (relu(bias) of pad rows would pollute the pool)
    row = m * tm + lax.broadcasted_iota(jnp.int32, (tm, 1), 0)
    acts = jnp.where(row < m_valid, acts, 0.0)

    acc_ref[...] += jnp.sum(acts, axis=0, keepdims=True)

    @pl.when(m == pl.num_programs(1) - 1)
    def _fini():
        # divide by the TRUE pixel count, not the padded one
        o_ref[0] = acc_ref[...] * (1.0 / float(m_valid))


def conv_pool_pallas(patches, w_mat, conv_b, *, m_valid, tm):
    S, m_pad, k_pad = patches.shape
    f_pad = w_mat.shape[1]
    grid = (S, m_pad // tm)
    out = pl.pallas_call(
        functools.partial(_conv_pool_kernel, m_valid=m_valid, tm=tm),
        out_shape=jax.ShapeDtypeStruct((S, 1, f_pad), jnp.float32),
        grid_spec=pltpu.PrefetchScalarGridSpec(
            num_scalar_prefetch=0,
            grid=grid,
            in_specs=[
                pl.BlockSpec((1, tm, k_pad), lambda s, m: (s, m, 0)),
                pl.BlockSpec((k_pad, f_pad), lambda s, m: (0, 0)),
                pl.BlockSpec((1, f_pad), lambda s, m: (0, 0)),
            ],
            out_specs=pl.BlockSpec((1, 1, f_pad), lambda s, m: (s, 0, 0)),
            scratch_shapes=[pltpu.VMEM((1, f_pad), jnp.float32)],
        ),
        compiler_params=pltpu.CompilerParams(
            dimension_semantics=("parallel", "arbitrary"),
            vmem_limit_bytes=32 * 1024 * 1024,
        ),
    )(patches, w_mat, conv_b)
    return out.reshape(S, f_pad)


# ----------------------------------------------------------------------------
# Pallas kernel 2: linear head (VPU broadcast-multiply) + adversarial / class /
# regression losses.  Everything is tiny (N x 128), single invocation.
# ----------------------------------------------------------------------------
def _semisl_loss_kernel(feat_ref, hw_ref, hb_ref, cls_logit_ref, cls_tgt_ref,
                        reg_pred_ref, reg_tgt_ref, adv_o, cls_o, reg_o,
                        *, n, smoothing):
    feats = feat_ref[...]                                   # (2N, F_pad) f32
    w_row = hw_ref[...]                                     # (1, F_pad)  f32
    # head: (N,F)@(F,1) replaced by broadcast-multiply + lane reduction (VPU/XLU)
    logit = jnp.sum(feats * w_row, axis=-1, keepdims=True) + hb_ref[0]   # (2N, 1)
    gen_logit = logit[:n]
    real_logit = logit[n:]

    def bce_with_logits(x, t):
        # numerically stable binary_cross_entropy_with_logits, elementwise
        return jnp.maximum(x, 0.0) - x * t + jnp.log(1.0 + jnp.exp(-jnp.abs(x)))

    # generator loss: BCE(gen_logit, ones)
    gen_adv = jnp.sum(bce_with_logits(gen_logit, 1.0)) / n
    # discriminator loss: BCE(cat(real, gen), cat(ones*(1-s), zeros))
    disc_adv = (jnp.sum(bce_with_logits(real_logit, 1.0 - smoothing))
                + jnp.sum(bce_with_logits(gen_logit, 0.0))) / (2 * n)
    adv_o[0, 0] = gen_adv + disc_adv

    # cross entropy vs integer targets (gathered in-kernel; no dense one-hot input)
    logits = cls_logit_ref[...].astype(jnp.float32)         # (N, K)
    tgt = cls_tgt_ref[...]                                  # (N, 1) int32
    nrow, kcls = logits.shape
    iota_k = lax.broadcasted_iota(jnp.int32, (nrow, kcls), 1)
    picked = jnp.sum(jnp.where(iota_k == tgt, logits, 0.0), axis=-1, keepdims=True)
    mx = jnp.max(logits, axis=-1, keepdims=True)
    lse = jnp.log(jnp.sum(jnp.exp(logits - mx), axis=-1, keepdims=True)) + mx
    cls_o[0, 0] = jnp.sum(lse - picked) / nrow

    # mse
    diff = reg_pred_ref[...].astype(jnp.float32) - reg_tgt_ref[...].astype(jnp.float32)
    reg_o[0, 0] = jnp.sum(diff * diff) / diff.size


def semisl_losses_pallas(feats, head_w_row, head_b, cls_logits, cls_tgt,
                         reg_pred, reg_tgt, *, n, smoothing):
    vmem = pl.BlockSpec(memory_space=pltpu.MemorySpace.VMEM)
    smem = pl.BlockSpec(memory_space=pltpu.MemorySpace.SMEM)
    out_shape = (jax.ShapeDtypeStruct((1, 1), jnp.float32),
                 jax.ShapeDtypeStruct((1, 1), jnp.float32),
                 jax.ShapeDtypeStruct((1, 1), jnp.float32))
    adv, cls, reg = pl.pallas_call(
        functools.partial(_semisl_loss_kernel, n=n, smoothing=smoothing),
        out_shape=out_shape,
        in_specs=[vmem, vmem, smem, vmem, vmem, vmem, vmem],
        out_specs=(smem, smem, smem),
    )(feats, head_w_row, head_b, cls_logits, cls_tgt, reg_pred, reg_tgt)
    return adv[0, 0], cls[0, 0], reg[0, 0]


# ----------------------------------------------------------------------------
# Glue: synthetic discriminator (Conv3x3 -> ReLU -> global avg pool -> Linear(F,1))
# ----------------------------------------------------------------------------
def im2col_padded(x_nchw, *, k_pad, kh=3, kw=3):
    """NCHW -> (S, M_pad, K_pad) bf16 patches (zero-padded to lane-dense shapes)."""
    S, C, H, W = x_nchw.shape
    x = jnp.transpose(x_nchw, (0, 2, 3, 1))                     # NHWC
    OH, OW = H - kh + 1, W - kw + 1
    cols = [x[:, ki:ki + OH, kj:kj + OW, :]
            for ki in range(kh) for kj in range(kw)]            # each (S, OH, OW, C)
    patches = jnp.concatenate(cols, axis=-1).reshape(S, OH * OW, kh * kw * C)
    m_valid = OH * OW
    k = kh * kw * C
    tm = _choose_tm(m_valid, k_pad)
    m_pad = _round_up(m_valid, tm)
    patches = jnp.pad(patches, ((0, 0), (0, m_pad - m_valid), (0, k_pad - k)))
    return patches.astype(jnp.bfloat16), m_valid, tm


def make_discriminator_params(key, in_channels, features, *, f_pad=128):
    k1, k2, k3, k4 = jax.random.split(key, 4)
    conv_w = jax.random.normal(k1, (features, in_channels, 3, 3), jnp.float32) * 0.1
    conv_b = jax.random.normal(k2, (1, features), jnp.float32) * 0.1
    head_w = jax.random.normal(k3, (features, 1), jnp.float32) * 0.1
    head_b = jax.random.normal(k4, (1,), jnp.float32) * 0.1

    k = 3 * 3 * in_channels
    k_pad = _round_up(k, 128)
    # matmul weight consistent with im2col ordering [(ki*kw+kj)*C + c]; zero-pad
    # K rows and F columns so pad lanes contribute exactly zero through ReLU/pool.
    w_mat = jnp.transpose(conv_w, (2, 3, 1, 0)).reshape(k, features)
    w_mat = jnp.pad(w_mat, ((0, k_pad - k), (0, f_pad - features))).astype(jnp.bfloat16)
    conv_b_p = jnp.pad(conv_b, ((0, 0), (0, f_pad - features)))            # (1, F_pad)
    head_w_row = jnp.pad(head_w.T, ((0, 0), (0, f_pad - features)))        # (1, F_pad)
    return {"conv_w_mat": w_mat, "conv_b": conv_b_p,
            "head_w_row": head_w_row, "head_b": head_b,
            "k_pad": k_pad, "f_pad": f_pad}


def semisl_adversarial_loss(gen_samples, real_samples, disc_params,
                            class_pred, class_target, reg_pred, reg_target,
                            smoothing=0.0):
    n = gen_samples.shape[0]
    # one pipelined discriminator pass over gen+real concatenated on the batch axis
    x_all = jnp.concatenate([gen_samples, real_samples], axis=0)    # (2N, C, H, W)
    patches, m_valid, tm = im2col_padded(x_all, k_pad=disc_params["k_pad"])
    feats = conv_pool_pallas(patches, disc_params["conv_w_mat"],
                             disc_params["conv_b"], m_valid=m_valid, tm=tm)
    adv, cls, reg = semisl_losses_pallas(
        feats, disc_params["head_w_row"], disc_params["head_b"],
        class_pred.astype(jnp.float32),
        class_target.astype(jnp.int32).reshape(-1, 1),
        reg_pred.astype(jnp.float32), reg_target.astype(jnp.float32),
        n=n, smoothing=float(smoothing))
    return {"adversarial": adv, "class": cls, "reg": reg}


if __name__ == "__main__":
    key = jax.random.PRNGKey(0)
    k_gen, k_real, k_cls, k_tgt, k_rp, k_rt, k_disc = jax.random.split(key, 7)

    N, C, H, W = 2, 4, 16, 16
    K_CLASSES, R_DIM, FEATS = 5, 3, 8

    gen_samples = jax.random.normal(k_gen, (N, C, H, W), jnp.float32)
    real_samples = jax.random.normal(k_real, (N, C, H, W), jnp.float32)
    class_pred = jax.random.normal(k_cls, (N, K_CLASSES), jnp.float32)
    class_target = jax.random.randint(k_tgt, (N,), 0, K_CLASSES)
    reg_pred = jax.random.normal(k_rp, (N, R_DIM), jnp.float32)
    reg_target = jax.random.normal(k_rt, (N, R_DIM), jnp.float32)

    disc_params = make_discriminator_params(k_disc, C, FEATS)

    losses = semisl_adversarial_loss(
        gen_samples, real_samples, disc_params,
        class_pred, class_target, reg_pred, reg_target,
        smoothing=0.1)

    jax.block_until_ready(losses)
    assert all(jnp.isfinite(v) for v in losses.values())
    print("KERNEL_OK")
</pallas_src>

<mosaic_0001>
module attributes {stable_mosaic.version = 11 : i64} {
  func.func @_conv_pool_kernel(%arg0: i32, %arg1: i32, %arg2: memref<1x200x128xbf16, #tpu.memory_space<vmem>>, %arg3: memref<128x128xbf16, #tpu.memory_space<vmem>>, %arg4: memref<1x128xf32, #tpu.memory_space<vmem>>, %arg5: memref<1x1x128xf32, #tpu.memory_space<vmem>>, %arg6: memref<1x128xf32, #tpu.memory_space<vmem>>) attributes {dimension_semantics = [#tpu.dimension_semantics<parallel>, #tpu.dimension_semantics<arbitrary>], iteration_bounds = array<i64: 4, 1>, scalar_prefetch = 0 : i64, scratch_operands = 1 : i64, tpu.core_type = #tpu.core_type<tc>, window_params = [{transform_indices = @transform_0, window_bounds = array<i64: 1, 200, 128>}, {pipeline_mode = #tpu.pipeline_mode<synchronous>, transform_indices = @transform_1, window_bounds = array<i64: 128, 128>}, {pipeline_mode = #tpu.pipeline_mode<synchronous>, transform_indices = @transform_2, window_bounds = array<i64: 1, 128>}, {transform_indices = @transform_3, window_bounds = array<i64: 1, 1, 128>}]} {
    %c0_i32 = arith.constant 0 : i32
    %0 = arith.cmpi eq, %arg1, %c0_i32 : i32
    %1 = arith.extui %0 : i1 to i32
    %c0_i32_0 = arith.constant 0 : i32
    %2 = arith.cmpi ne, %1, %c0_i32_0 : i32
    scf.if %2 {
      %cst_16 = arith.constant 0.000000e+00 : f32
      %30 = vector.broadcast %cst_16 : f32 to vector<1x128xf32>
      %c0_17 = arith.constant 0 : index
      %c0_18 = arith.constant 0 : index
      %31 = vector.load %arg6[%c0_17, %c0_18] : memref<1x128xf32, #tpu.memory_space<vmem>>, vector<1x128xf32>
      tpu.vector_store %arg6[%c0_17, %c0_18], %30 {strides = array<i32>} : memref<1x128xf32, #tpu.memory_space<vmem>>, vector<1x128xf32>,
    } else {
    }
    %c0 = arith.constant 0 : index
    %c0_1 = arith.constant 0 : index
    %c0_2 = arith.constant 0 : index
    %3 = vector.load %arg2[%c0, %c0_1, %c0_2] : memref<1x200x128xbf16, #tpu.memory_space<vmem>>, vector<1x200x128xbf16>
    %4 = vector.shape_cast %3 : vector<1x200x128xbf16> to vector<200x128xbf16>
    %c0_3 = arith.constant 0 : index
    %c0_4 = arith.constant 0 : index
    %5 = vector.load %arg3[%c0_3, %c0_4] : memref<128x128xbf16, #tpu.memory_space<vmem>>, vector<128x128xbf16>
    %cst = arith.constant dense<0.000000e+00> : vector<200x128xf32>
    %6 = tpu.matmul %4, %5, %cst {dimension_numbers = #tpu.dot_dimension_numbers<[1], [0], [0], [1], [0, 0, 1, 1], [], []>} : vector<200x128xbf16>, vector<128x128xbf16>, vector<200x128xf32> -> vector<200x128xf32>
    %c0_5 = arith.constant 0 : index
    %c0_6 = arith.constant 0 : index
    %7 = vector.load %arg4[%c0_5, %c0_6] : memref<1x128xf32, #tpu.memory_space<vmem>>, vector<1x128xf32>
    %8 = vector.broadcast %7 : vector<1x128xf32> to vector<200x128xf32>
    %9 = arith.addf %6, %8 : vector<200x128xf32>
    %cst_7 = arith.constant 0.000000e+00 : f32
    %10 = vector.broadcast %cst_7 : f32 to vector<200x128xf32>
    %11 = arith.maximumf %9, %10 : vector<200x128xf32>
    %c200_i32 = arith.constant 200 : i32
    %12 = arith.muli %arg1, %c200_i32 : i32
    %13 = tpu.iota {dimensions = array<i32: 0>} : vector<200x1xi32>
    %14 = vector.broadcast %12 : i32 to vector<200x1xi32>
    %15 = arith.addi %14, %13 : vector<200x1xi32>
    %c196_i32 = arith.constant 196 : i32
    %16 = vector.broadcast %c196_i32 : i32 to vector<200x1xi32>
    %17 = arith.cmpi slt, %15, %16 : vector<200x1xi32>
    %cst_8 = arith.constant 0.000000e+00 : f32
    %18 = vector.shape_cast %17 : vector<200x1xi1> to vector<200x1xi1>
    %19 = vector.broadcast %18 : vector<200x1xi1> to vector<200x128xi1>
    %20 = vector.broadcast %cst_8 : f32 to vector<200x128xf32>
    %21 = arith.select %19, %11, %20 : vector<200x128xi1>, vector<200x128xf32>
    %c0_9 = arith.constant 0 : index
    %c0_10 = arith.constant 0 : index
    %22 = vector.load %arg6[%c0_9, %c0_10] : memref<1x128xf32, #tpu.memory_space<vmem>>, vector<1x128xf32>
    %cst_11 = arith.constant dense<0.000000e+00> : vector<128xf32>
    %23 = vector.multi_reduction <add>, %21, %cst_11 [0] : vector<200x128xf32> to vector<128xf32>
    %24 = vector.shape_cast %23 : vector<128xf32> to vector<1x128xf32>
    %25 = arith.addf %22, %24 : vector<1x128xf32>
    %c0_12 = arith.constant 0 : index
    %c0_13 = arith.constant 0 : index
    %26 = vector.load %arg6[%c0_12, %c0_13] : memref<1x128xf32, #tpu.memory_space<vmem>>, vector<1x128xf32>
    tpu.vector_store %arg6[%c0_12, %c0_13], %25 {strides = array<i32>} : memref<1x128xf32, #tpu.memory_space<vmem>>, vector<1x128xf32>,
    %c0_i32_14 = arith.constant 0 : i32
    %27 = arith.cmpi eq, %arg1, %c0_i32_14 : i32
    %28 = arith.extui %27 : i1 to i32
    %c0_i32_15 = arith.constant 0 : i32
    %29 = arith.cmpi ne, %28, %c0_i32_15 : i32
    scf.if %29 {
      %c0_16 = arith.constant 0 : index
      %c0_17 = arith.constant 0 : index
      %30 = vector.load %arg6[%c0_16, %c0_17] : memref<1x128xf32, #tpu.memory_space<vmem>>, vector<1x128xf32>
      %cst_18 = arith.constant 0.00510204071 : f32
      %31 = vector.broadcast %cst_18 : f32 to vector<1x128xf32>
      %32 = arith.mulf %30, %31 : vector<1x128xf32>
      %c0_19 = arith.constant 0 : index
      %c0_20 = arith.constant 0 : index
      %c0_21 = arith.constant 0 : index
      %33 = vector.load %arg5[%c0_19, %c0_20, %c0_21] : memref<1x1x128xf32, #tpu.memory_space<vmem>>, vector<1x1x128xf32>
      %34 = vector.shape_cast %33 : vector<1x1x128xf32> to vector<1x128xf32>
      %35 = vector.shape_cast %32 : vector<1x128xf32> to vector<1x1x128xf32>
      tpu.vector_store %arg5[%c0_19, %c0_20, %c0_21], %35 {strides = array<i32>} : memref<1x1x128xf32, #tpu.memory_space<vmem>>, vector<1x1x128xf32>,
    } else {
    }
    return
  }
  func.func @transform_0(%arg0: i32, %arg1: i32) -> (i32, i32, i32) {
    %c0_i32 = arith.constant 0 : i32
    %c0_i32_0 = arith.constant 0 : i32
    return %arg0, %arg1, %c0_i32 : i32, i32, i32
  }
  func.func @transform_1(%arg0: i32, %arg1: i32) -> (i32, i32) {
    %c0_i32 = arith.constant 0 : i32
    %c0_i32_0 = arith.constant 0 : i32
    %c0_i32_1 = arith.constant 0 : i32
    return %c0_i32, %c0_i32_0 : i32, i32
  }
  func.func @transform_2(%arg0: i32, %arg1: i32) -> (i32, i32) {
    %c0_i32 = arith.constant 0 : i32
    %c0_i32_0 = arith.constant 0 : i32
    %c0_i32_1 = arith.constant 0 : i32
    return %c0_i32, %c0_i32_0 : i32, i32
  }
  func.func @transform_3(%arg0: i32, %arg1: i32) -> (i32, i32, i32) {
    %c0_i32 = arith.constant 0 : i32
    %c0_i32_0 = arith.constant 0 : i32
    %c0_i32_1 = arith.constant 0 : i32
    return %arg0, %c0_i32, %c0_i32_0 : i32, i32, i32
  }
}

</mosaic_0001>

<llo_original>
// kernel: tpu_custom_call.1
$region0: #{tpu_custom_call.1}
  #allocation0 [shape = 'u32[]', space=smem, size = 0x4, offset = 0x4, fixed_abs, tag = 'smem constant byte address 0x4 - core index']
  #allocation1 [shape = 'u32[144,128]{1,0:T(1,128)}', space=vmem, size = 0x12000, scoped, tag = 'internal scratch']
  #allocation2 [shape = 'f32[1,128]{1,0:T(1,128)}', space=vmem, size = 0x200, scoped, tag = 'scratch operand']
  %s0 = inlined_call_operand.hbm [shape: bf16[4,200,128], index: 0, kind: input, shape index: {}]
  %s1 = inlined_call_operand.hbm [shape: bf16[128,128], index: 1, kind: input, shape index: {}]
  %s2 = inlined_call_operand.vmem [shape: f32[1,128], index: 2, kind: input, shape index: {}]
  %s3 = inlined_call_operand.hbm [shape: f32[4,1,128], index: 3, kind: output, shape index: {}]
  %s4 = sld [smem:[#allocation0]]
  $region61: #{tpu_custom_call.1} parent=0
    _
  %s6 = ssub.s32 1, %s4
  %s7 = scalar_select 0, %s6, %s4
  $region1: #{tpu_custom_call.1} parent=0
    #allocation3 [shape = 'u8[102400]{0}', space=vmem, size = 0x19000, scoped, tag = 'input window, operand 0']
    #allocation4 [shape = 's32[2]{0}', space=sflag, size = 0x8, scoped, tag = 'scoped memory for tpu_custom_call.1']
    #allocation5 [shape = 's32[2]{0}', space=sflag, size = 0x8, scoped, tag = 'scoped memory for tpu_custom_call.1']
    #allocation6 [shape = 'u8[32768]{0}', space=vmem, size = 0x8000, scoped, tag = 'input window, operand 1, single buffered']
    #allocation7 [shape = 's32[1]{0}', space=sflag, size = 0x4, scoped, tag = 'scoped memory for tpu_custom_call.1']
    #allocation8 [shape = 'u8[1024]{0}', space=vmem, size = 0x400, scoped, tag = 'output window, operand 0']
    %8 = vsyncpa [#allocation4], 0
    %s9 = scalar_lea.sflag [#allocation4], 1
    %10 = vsyncpa %s9, 0
    %11 = vsyncpa [#allocation7], 0
    %12 = vsyncpa [#allocation5], 0
    %s13 = scalar_lea.sflag [#allocation5], 1
    %14 = vsyncpa %s13, 0
    loop: start=0, step=1, limit=6
    $region2: #{tpu_custom_call.1} parent=1 // loop_pre_header
      _
    $region3: #{tpu_custom_call.1} parent=1 // loop_header
      %s16 = sphi 0, %s20
      %p17 = scmp.ge.s32.totalorder %s16, 6
      %s23 = sphi 0, %s35
      %s24 = sphi 0, %s31
      %s25 = sphi 0, %s23
      %s26 = sphi 0, %s24
      %s27 = sphi 0, %s25
      %s28 = sphi 0, %s26
      %s40 = sphi 0, %s42
      %s43 = sphi 0, %s40
      %s44 = sphi 0, %s43
      %s60 = sphi 0, %s44
      %s64 = sphi 0, %s64
      %s66 = sphi 0, %s64
      %s67 = sphi 0, %s66
      %s81 = sphi 0, %s67
      %s85 = sphi 0, %s85
      %s87 = sphi 0, %s85
      %s88 = sphi 0, %s87
      %s102 = sphi 0, %s88
      %s108 = sphi 0, %s110
      %s111 = sphi 0, %s108
      %s112 = sphi 0, %s111
      %s128 = sphi 0, %s112
    $region4: #{tpu_custom_call.1} parent=1 // loop_header_branch
      %19 = sbr.rel (%p17) target = $region8
    $region5: #{tpu_custom_call.1} parent=1 // loop_body
      %s21 = ssub.s32 %s16, 1
      %s22 = ssub.s32 %s16, 2
      %s29 = sadd.s32 1, %s24
      %p30 = scmp.ge.s32.totalorder %s29, 1
      %s31 = scalar_select %p30, 0, %s29
      %s32 = sadd.s32 1, %s23
      %s33 = scalar_select %p30, %s32, %s23
      %p34 = scmp.ge.s32.totalorder %s33, 4
      %s35 = scalar_select %p34, 0, %s33
      %s36 = ssub.s32 %s23, %s35
      %s37 = ssub.s32 %s24, %s31
      %s38 = sor.u32 %s36, %s37
      %p39 = scmp.eq.s32.totalorder %s38, 0
      %s41 = sadd.s32 %s40, 1
      %s42 = scalar_select %p39, %s40, %s41
      %p45 = pneg %p39
      %p46 = scmp.eq.s32.totalorder %s16, 3
      %p47 = por %p45, %p46
      %p48 = scmp.ne.s32.totalorder %s40, %s43
      %p49 = scmp.eq.s32.totalorder %s16, 0
      %p50 = por %p48, %p49
      %p51 = scmp.ne.s32.totalorder %s40, %s43
      %p52 = scmp.eq.s32.totalorder %s21, 3
      %p53 = por %p51, %p52
      %p54 = scmp.ne.s32.totalorder %s43, %s44
      %p55 = scmp.eq.s32.totalorder %s21, 0
      %p56 = por %p54, %p55
      %p57 = scmp.ne.s32.totalorder %s43, %s44
      %p58 = scmp.eq.s32.totalorder %s22, 3
      %p59 = por %p57, %p58
      %p61 = scmp.ne.s32.totalorder %s44, %s60
      %p62 = scmp.eq.s32.totalorder %s22, 0
      %p63 = por %p61, %p62
      %s65 = sadd.s32 %s64, 1
      %p68 = scmp.eq.s32.totalorder %s16, 3
      %p69 = scmp.ne.s32.totalorder %s64, %s66
      %p70 = scmp.eq.s32.totalorder %s16, 0
      %p71 = por %p69, %p70
      %p72 = scmp.ne.s32.totalorder %s64, %s66
      %p73 = scmp.eq.s32.totalorder %s21, 3
      %p74 = por %p72, %p73
      %p75 = scmp.ne.s32.totalorder %s66, %s67
      %p76 = scmp.eq.s32.totalorder %s21, 0
      %p77 = por %p75, %p76
      %p78 = scmp.ne.s32.totalorder %s66, %s67
      %p79 = scmp.eq.s32.totalorder %s22, 3
      %p80 = por %p78, %p79
      %p82 = scmp.ne.s32.totalorder %s67, %s81
      %p83 = scmp.eq.s32.totalorder %s22, 0
      %p84 = por %p82, %p83
      %s86 = sadd.s32 %s85, 1
      %p89 = scmp.eq.s32.totalorder %s16, 3
      %p90 = scmp.ne.s32.totalorder %s85, %s87
      %p91 = scmp.eq.s32.totalorder %s16, 0
      %p92 = por %p90, %p91
      %p93 = scmp.ne.s32.totalorder %s85, %s87
      %p94 = scmp.eq.s32.totalorder %s21, 3
      %p95 = por %p93, %p94
      %p96 = scmp.ne.s32.totalorder %s87, %s88
      %p97 = scmp.eq.s32.totalorder %s21, 0
      %p98 = por %p96, %p97
      %p99 = scmp.ne.s32.totalorder %s87, %s88
      %p100 = scmp.eq.s32.totalorder %s22, 3
      %p101 = por %p99, %p100
      %p103 = scmp.ne.s32.totalorder %s88, %s102
      %p104 = scmp.eq.s32.totalorder %s22, 0
      %p105 = por %p103, %p104
      %s106 = ssub.s32 %s23, %s35
      %p107 = scmp.eq.s32.totalorder %s106, 0
      %s109 = sadd.s32 %s108, 1
      %s110 = scalar_select %p107, %s108, %s109
      %p113 = pneg %p107
      %p114 = scmp.eq.s32.totalorder %s16, 3
      %p115 = por %p113, %p114
      %p116 = scmp.ne.s32.totalorder %s108, %s111
      %p117 = scmp.eq.s32.totalorder %s16, 0
      %p118 = por %p116, %p117
      %p119 = scmp.ne.s32.totalorder %s108, %s111
      %p120 = scmp.eq.s32.totalorder %s21, 3
      %p121 = por %p119, %p120
      %p122 = scmp.ne.s32.totalorder %s111, %s112
      %p123 = scmp.eq.s32.totalorder %s21, 0
      %p124 = por %p122, %p123
      %p125 = scmp.ne.s32.totalorder %s111, %s112
      %p126 = scmp.eq.s32.totalorder %s22, 3
      %p127 = por %p125, %p126
      %p129 = scmp.ne.s32.totalorder %s112, %s128
      %p130 = scmp.eq.s32.totalorder %s22, 0
      %p131 = por %p129, %p130
      %p132 = scmp.le.s32.totalorder 1, %s16
      %p133 = scmp.lt.s32.totalorder %s16, 5
      %p134 = pnand %p132, %p133
      %p135 = pneg %p134
      // Predicated region
      $region9: #{tpu_custom_call.1} parent=5 // pred_check
        _
      $region10: #{tpu_custom_call.1} parent=5 // pred_check_branch
        %137 = sbr.rel (%p134) target = $region12
      $region11: #{tpu_custom_call.1} parent=5 // pred_region
        %s138 = ssub.s32 %s16, 1
        // Predicated region
        $region13: #{tpu_custom_call.1} parent=11 // pred_check
          %p139 = pneg %p77
        $region14: #{tpu_custom_call.1} parent=11 // pred_check_branch
          %141 = sbr.rel (%p139) target = $region16
        $region15: #{tpu_custom_call.1} parent=11 // pred_region
          %s143 = ssub.s32 1024, 1024
          %144 = vsyncadd [#allocation7], %s143
          %s145 = sshll.u32 [#allocation6], 4
          %s146 = int_to_ptr.vmem [resolvable:$true] %s145
          %151 = dma.hbm_to_vmem [thread:$0]  %s1, 1024, %s146, [#allocation7], 64, 64, 4
        $region16: #{tpu_custom_call.1} parent=11 // pred_fallthru
          _
        // Predicated region
        $region17: #{tpu_custom_call.1} parent=11 // pred_check
          %p152 = pneg %p98
        $region18: #{tpu_custom_call.1} parent=11 // pred_check_branch
          %154 = sbr.rel (%p152) target = $region20
        $region19: #{tpu_custom_call.1} parent=11 // pred_region
          _
        $region20: #{tpu_custom_call.1} parent=11 // pred_fallthru
          _
      $region12: #{tpu_custom_call.1} parent=5 // pred_fallthru
        _
      %p155 = scmp.lt.s32.totalorder %s16, 4
      // Predicated region
      $region21: #{tpu_custom_call.1} parent=5 // pred_check
        %p156 = pneg %p155
      $region22: #{tpu_custom_call.1} parent=5 // pred_check_branch
        %158 = sbr.rel (%p156) target = $region24
      $region23: #{tpu_custom_call.1} parent=5 // pred_region
        // Predicated region
        $region25: #{tpu_custom_call.1} parent=23 // pred_check
          %p159 = pneg %p50
        $region26: #{tpu_custom_call.1} parent=23 // pred_check_branch
          %161 = sbr.rel (%p159) target = $region28
        $region27: #{tpu_custom_call.1} parent=23 // pred_region
          %s162 = sand.u32 %s40, 1
          %s163 = scalar_lea.sflag [#allocation4], %s162
          %s164 = sand.u32 %s40, 1
          %s165 = smul.addr %s164, 100
          %s166 = scalar_lea.vmem [#allocation3], %s165
          %s167 = smul.u32 25, %s24
          %s169 = ssub.s32 1600, 1600
          %170 = vsyncadd %s163, %s169
          %s171 = smul.addr %s23, 25
          %s172 = sadd.s32 %s167, %s171
          %s173 = smul.addr %s172, 64
          %s174 = scalar_lea.hbm %s0, %s173
          %s175 = sshll.u32 %s166, 4
          %s176 = int_to_ptr.vmem [resolvable:$true] %s175
          %181 = dma.hbm_to_vmem [thread:$0]  %s174, 1600, %s176, %s163, 64, 64, 4
        $region28: #{tpu_custom_call.1} parent=23 // pred_fallthru
          _
      $region24: #{tpu_custom_call.1} parent=5 // pred_fallthru
        _
      %p182 = scmp.le.s32.totalorder 1, %s16
      %p183 = scmp.lt.s32.totalorder %s16, 5
      %p184 = pnand %p182, %p183
      %p185 = pneg %p184
      // Predicated region
      $region29: #{tpu_custom_call.1} parent=5 // pred_check
        _
      $region30: #{tpu_custom_call.1} parent=5 // pred_check_branch
        %187 = sbr.rel (%p184) target = $region32
      $region31: #{tpu_custom_call.1} parent=5 // pred_region
        %s188 = ssub.s32 %s16, 1
        %s189 = sand.u32 %s43, 1
        %s190 = scalar_lea.sflag [#allocation4], %s189
        %s191 = sand.u32 %s43, 1
        %s192 = smul.addr %s191, 100
        %s193 = scalar_lea.vmem [#allocation3], %s192
        // Predicated region
        $region33: #{tpu_custom_call.1} parent=31 // pred_check
          %p194 = pneg %p56
        $region34: #{tpu_custom_call.1} parent=31 // pred_check_branch
          %196 = sbr.rel (%p194) target = $region36
        $region35: #{tpu_custom_call.1} parent=31 // pred_region
          %197 = dma.done %s190, 1600
        $region36: #{tpu_custom_call.1} parent=31 // pred_fallthru
          _
        // Predicated region
        $region37: #{tpu_custom_call.1} parent=31 // pred_check
          %p198 = pneg %p77
        $region38: #{tpu_custom_call.1} parent=31 // pred_check_branch
          %200 = sbr.rel (%p198) target = $region40
        $region39: #{tpu_custom_call.1} parent=31 // pred_region
          %201 = dma.done [#allocation7], 1024
        $region40: #{tpu_custom_call.1} parent=31 // pred_fallthru
          _
        %s202 = sand.u32 %s43, 1
        %s203 = scalar_lea.sflag [#allocation4], %s202
        %s204 = sand.u32 %s43, 1
        %s205 = smul.addr %s204, 100
        %s206 = scalar_lea.vmem [#allocation3], %s205
        %p207 = pneg %p56
        %p208 = pneg %p53
        %p209 = pneg %p77
        %p210 = pneg %p74
        %p211 = pneg %p98
        %p212 = pneg %p95
        %p213 = pneg %p124
        %p214 = pneg %p121
        %s215 = sand.u32 %s111, 1
        %s216 = scalar_lea.sflag [#allocation5], %s215
        %s217 = sand.u32 %s111, 1
        %s218 = scalar_lea.vmem [#allocation8], %s217
        %s219 = smul.u32 25, %s26
        %p221 = scmp.eq.s32.totalorder %s26, 0
        // Predicated region
        $region41: #{tpu_custom_call.1} parent=31 // pred_check
          %p222 = pneg %p221
        $region42: #{tpu_custom_call.1} parent=31 // pred_check_branch
          %224 = sbr.rel (%p222) target = $region44
        $region43: #{tpu_custom_call.1} parent=31 // pred_region
          %225 = vst [vmem:[#allocation2] sm:$0x1] 0.0
        $region44: #{tpu_custom_call.1} parent=31 // pred_fallthru
          _
        %v226 = vld [vmem:[%s193] sm:$0xf]
        %v227 = vld [vmem:[%s193 + $0x4] sm:$0xf]
        %v228 = vld [vmem:[%s193 + $0x8] sm:$0xf]
        %v229 = vld [vmem:[%s193 + $0xc] sm:$0xf]
        %v230 = vld [vmem:[%s193 + $0x10] sm:$0xf]
        %v231 = vld [vmem:[%s193 + $0x14] sm:$0xf]
        %v232 = vld [vmem:[%s193 + $0x18] sm:$0xf]
        %v233 = vld [vmem:[%s193 + $0x1c] sm:$0xf]
        %v234 = vld [vmem:[%s193 + $0x20] sm:$0xf]
        %v235 = vld [vmem:[%s193 + $0x24] sm:$0xf]
        %v236 = vld [vmem:[%s193 + $0x28] sm:$0xf]
        %v237 = vld [vmem:[%s193 + $0x2c] sm:$0xf]
        %v238 = vld [vmem:[%s193 + $0x30] sm:$0xf]
        %v239 = vld [vmem:[%s193 + $0x34] sm:$0xf]
        %v240 = vld [vmem:[%s193 + $0x38] sm:$0xf]
        %v241 = vld [vmem:[%s193 + $0x3c] sm:$0xf]
        %v242 = vld [vmem:[%s193 + $0x40] sm:$0xf]
        %v243 = vld [vmem:[%s193 + $0x44] sm:$0xf]
        %v244 = vld [vmem:[%s193 + $0x48] sm:$0xf]
        %v245 = vld [vmem:[%s193 + $0x4c] sm:$0xf]
        %v246 = vld [vmem:[%s193 + $0x50] sm:$0xf]
        %v247 = vld [vmem:[%s193 + $0x54] sm:$0xf]
        %v248 = vld [vmem:[%s193 + $0x58] sm:$0xf]
        %v249 = vld [vmem:[%s193 + $0x5c] sm:$0xf]
        %v250 = vld [vmem:[%s193 + $0x60] sm:$0xf]
        %v251 = vld [vmem:[#allocation6] sm:$0xf]
        %v252 = vld [vmem:[#allocation6 + $0x4] sm:$0xf]
        %v253 = vld [vmem:[#allocation6 + $0x8] sm:$0xf]
        %v254 = vld [vmem:[#allocation6 + $0xc] sm:$0xf]
        %v255 = vld [vmem:[#allocation6 + $0x10] sm:$0xf]
        %v256 = vld [vmem:[#allocation6 + $0x14] sm:$0xf]
        %v257 = vld [vmem:[#allocation6 + $0x18] sm:$0xf]
        %v258 = vld [vmem:[#allocation6 + $0x1c] sm:$0xf]
        %v259 = vld [vmem:[#allocation6 + $0x20] sm:$0xf]
        %v260 = vld [vmem:[#allocation6 + $0x24] sm:$0xf]
        %v261 = vld [vmem:[#allocation6 + $0x28] sm:$0xf]
        %v262 = vld [vmem:[#allocation6 + $0x2c] sm:$0xf]
        %v263 = vld [vmem:[#allocation6 + $0x30] sm:$0xf]
        %v264 = vld [vmem:[#allocation6 + $0x34] sm:$0xf]
        %v265 = vld [vmem:[#allocation6 + $0x38] sm:$0xf]
        %v266 = vld [vmem:[#allocation6 + $0x3c] sm:$0xf]
        %v267 = vld [vmem:[%s2] sm:$0x1]
        %v269 = vlaneseq
        %v270 = vshrl.u32 %v269, 7
        %v271 = vsub.s32 0, %v270
        %v272 = vrot.slane %v267, %v271
        %v299 = vunpack.c.l.b16 %v226
        %v300 = vunpack.c.l.b16 %v227
        %v301 = vunpack.c.l.b16 %v228
        %v302 = vunpack.c.l.b16 %v229
        %v303 = vunpack.c.l.b16 %v230
        %v304 = vunpack.c.l.b16 %v231
        %v305 = vunpack.c.l.b16 %v232
        %v306 = vunpack.c.l.b16 %v233
        %v307 = vunpack.c.l.b16 %v234
        %v308 = vunpack.c.l.b16 %v235
        %v309 = vunpack.c.l.b16 %v236
        %v310 = vunpack.c.l.b16 %v237
        %v311 = vunpack.c.l.b16 %v238
        %v312 = vunpack.c.l.b16 %v239
        %v313 = vunpack.c.l.b16 %v240
        %v314 = vunpack.c.l.b16 %v241
        %v315 = vunpack.c.l.b16 %v242
        %v316 = vunpack.c.l.b16 %v243
        %v317 = vunpack.c.l.b16 %v244
        %v318 = vunpack.c.l.b16 %v245
        %v319 = vunpack.c.l.b16 %v246
        %v320 = vunpack.c.l.b16 %v247
        %v321 = vunpack.c.l.b16 %v248
        %v322 = vunpack.c.l.b16 %v249
        %v323 = vunpack.c.l.b16 %v250
        %v324 = vpack.c.b16 %v300, %v299
        %v325 = vpack.c.b16 %v302, %v301
        %v326 = vpack.c.b16 %v304, %v303
        %v327 = vpack.c.b16 %v306, %v305
        %v328 = vpack.c.b16 %v308, %v307
        %v329 = vpack.c.b16 %v310, %v309
        %v330 = vpack.c.b16 %v312, %v311
        %v331 = vpack.c.b16 %v314, %v313
        %v332 = vpack.c.b16 %v316, %v315
        %v333 = vpack.c.b16 %v318, %v317
        %v334 = vpack.c.b16 %v320, %v319
        %v335 = vpack.c.b16 %v322, %v321
        %v336 = vpack.c.b16 %v323, %v323
        %v366 = vunpack.c.l.b16 %v251
        %v367 = vunpack.c.l.b16 %v252
        %v368 = vunpack.c.l.b16 %v253
        %v369 = vunpack.c.l.b16 %v254
        %v370 = vunpack.c.l.b16 %v255
        %v371 = vunpack.c.l.b16 %v256
        %v372 = vunpack.c.l.b16 %v257
        %v373 = vunpack.c.l.b16 %v258
        %v374 = vunpack.c.l.b16 %v259
        %v375 = vunpack.c.l.b16 %v260
        %v376 = vunpack.c.l.b16 %v261
        %v377 = vunpack.c.l.b16 %v262
        %v378 = vunpack.c.l.b16 %v263
        %v379 = vunpack.c.l.b16 %v264
        %v380 = vunpack.c.l.b16 %v265
        %v381 = vunpack.c.l.b16 %v266
        %v382 = vpack.c.b16 %v367, %v366
        %v383 = vpack.c.b16 %v369, %v368
        %v384 = vpack.c.b16 %v371, %v370
        %v385 = vpack.c.b16 %v373, %v372
        %v386 = vpack.c.b16 %v375, %v374
        %v387 = vpack.c.b16 %v377, %v376
        %v388 = vpack.c.b16 %v379, %v378
        %v389 = vpack.c.b16 %v381, %v380
        %398 = vmatprep.subr.bf16.mxu0 0
        %399 = vmatpush1.bf16.msra.mxu0 %v389
        %400 = vmatprep.subr.bf16.mxu0 0
        %401 = vmatpush1.bf16.msra.mxu0 %v388
        %402 = vmatprep.subr.bf16.mxu0 0
        %403 = vmatpush1.bf16.msra.mxu0 %v387
        %404 = vmatprep.subr.bf16.mxu0 0
        %405 = vmatpush1.bf16.msra.mxu0 %v386
        %406 = vmatprep.subr.bf16.mxu0 0
        %407 = vmatpush1.bf16.msra.mxu0 %v385
        %408 = vmatprep.subr.bf16.mxu0 0
        %409 = vmatpush1.bf16.msra.mxu0 %v384
        %410 = vmatprep.subr.bf16.mxu0 0
        %411 = vmatpush1.bf16.msra.mxu0 %v383
        %412 = vmatprep.subr.bf16.mxu0 0
        %413 = vmatpush1.bf16.msra.mxu0 %v382
        %414 = vmatprep.subr.bf16.mxu0 0
        %415 = vmatpush2.bf16.msra.mxu0 0
        %416 = vmatprep.subr.bf16.mxu0 0
        %417 = vmatpush2.bf16.msra.mxu0 0
        %418 = vmatprep.subr.bf16.mxu0 0
        %419 = vmatpush2.bf16.msra.mxu0 0
        %420 = vmatprep.subr.bf16.mxu0 0
        %421 = vmatpush2.bf16.msra.mxu0 0
        %422 = vmatprep.subr.bf16.mxu0 0
        %423 = vmatpush2.bf16.msra.mxu0 0
        %424 = vmatprep.subr.bf16.mxu0 0
        %425 = vmatpush2.bf16.msra.mxu0 0
        %426 = vmatprep.subr.bf16.mxu0 0
        %427 = vmatpush2.bf16.msra.mxu0 0
        %428 = vmatprep.subr.bf16.mxu0 0
        %429 = vmatpush2.bf16.msra.mxu0 0
        %430 = vmatprep.mubr.bf16.mxu0 0
        %431 = vmatmul.mubr.bf16.gmra.mxu0 %v324
        %v432 = vpop.f32.mrf.mxu0
        %v433 = vadd.f32 %v272, %v432
        %v434 = vpop.f32.mrf.mxu0
        %v435 = vpop.f32.mrf.mxu0
        %v436 = vadd.f32 %v272, %v435
        %v437 = vpop.f32.mrf.mxu0
        %438 = vmatprep.mubr.bf16.mxu0 0
        %439 = vmatmul.mubr.bf16.gmra.mxu0 %v325
        %v440 = vpop.f32.mrf.mxu0
        %v441 = vadd.f32 %v272, %v440
        %v442 = vpop.f32.mrf.mxu0
        %v443 = vpop.f32.mrf.mxu0
        %v444 = vadd.f32 %v272, %v443
        %v445 = vpop.f32.mrf.mxu0
        %446 = vmatprep.mubr.bf16.mxu0 0
        %447 = vmatmul.mubr.bf16.gmra.mxu0 %v326
        %v448 = vpop.f32.mrf.mxu0
        %v449 = vadd.f32 %v272, %v448
        %v450 = vpop.f32.mrf.mxu0
        %v451 = vpop.f32.mrf.mxu0
        %v452 = vadd.f32 %v272, %v451
        %v453 = vpop.f32.mrf.mxu0
        %454 = vmatprep.mubr.bf16.mxu0 0
        %455 = vmatmul.mubr.bf16.gmra.mxu0 %v327
        %v456 = vpop.f32.mrf.mxu0
        %v457 = vadd.f32 %v272, %v456
        %v458 = vpop.f32.mrf.mxu0
        %v459 = vpop.f32.mrf.mxu0
        %v460 = vadd.f32 %v272, %v459
        %v461 = vpop.f32.mrf.mxu0
        %462 = vmatprep.mubr.bf16.mxu0 0
        %463 = vmatmul.mubr.bf16.gmra.mxu0 %v328
        %v464 = vpop.f32.mrf.mxu0
        %v465 = vadd.f32 %v272, %v464
        %v466 = vpop.f32.mrf.mxu0
        %v467 = vpop.f32.mrf.mxu0
        %v468 = vadd.f32 %v272, %v467
        %v469 = vpop.f32.mrf.mxu0
        %470 = vmatprep.mubr.bf16.mxu0 0
        %471 = vmatmul.mubr.bf16.gmra.mxu0 %v329
        %v472 = vpop.f32.mrf.mxu0
        %v473 = vadd.f32 %v272, %v472
        %v474 = vpop.f32.mrf.mxu0
        %v475 = vpop.f32.mrf.mxu0
        %v476 = vadd.f32 %v272, %v475
        %v477 = vpop.f32.mrf.mxu0
        %478 = vmatprep.mubr.bf16.mxu0 0
        %479 = vmatmul.mubr.bf16.gmra.mxu0 %v330
        %v480 = vpop.f32.mrf.mxu0
        %v481 = vadd.f32 %v272, %v480
        %v482 = vpop.f32.mrf.mxu0
        %v483 = vpop.f32.mrf.mxu0
        %v484 = vadd.f32 %v272, %v483
        %v485 = vpop.f32.mrf.mxu0
        %486 = vmatprep.mubr.bf16.mxu0 0
        %487 = vmatmul.mubr.bf16.gmra.mxu0 %v331
        %v488 = vpop.f32.mrf.mxu0
        %v489 = vadd.f32 %v272, %v488
        %v490 = vpop.f32.mrf.mxu0
        %v491 = vpop.f32.mrf.mxu0
        %v492 = vadd.f32 %v272, %v491
        %v493 = vpop.f32.mrf.mxu0
        %494 = vmatprep.mubr.bf16.mxu0 0
        %495 = vmatmul.mubr.bf16.gmra.mxu0 %v332
        %v496 = vpop.f32.mrf.mxu0
        %v497 = vadd.f32 %v272, %v496
        %v498 = vpop.f32.mrf.mxu0
        %v499 = vpop.f32.mrf.mxu0
        %v500 = vadd.f32 %v272, %v499
        %v501 = vpop.f32.mrf.mxu0
        %502 = vmatprep.mubr.bf16.mxu0 0
        %503 = vmatmul.mubr.bf16.gmra.mxu0 %v333
        %v504 = vpop.f32.mrf.mxu0
        %v505 = vadd.f32 %v272, %v504
        %v506 = vpop.f32.mrf.mxu0
        %v507 = vpop.f32.mrf.mxu0
        %v508 = vadd.f32 %v272, %v507
        %v509 = vpop.f32.mrf.mxu0
        %510 = vmatprep.mubr.bf16.mxu0 0
        %511 = vmatmul.mubr.bf16.gmra.mxu0 %v334
        %v512 = vpop.f32.mrf.mxu0
        %v513 = vadd.f32 %v272, %v512
        %v514 = vpop.f32.mrf.mxu0
        %v515 = vpop.f32.mrf.mxu0
        %v516 = vadd.f32 %v272, %v515
        %v517 = vpop.f32.mrf.mxu0
        %518 = vmatprep.mubr.bf16.mxu0 0
        %519 = vmatmul.mubr.bf16.gmra.mxu0 %v335
        %v520 = vpop.f32.mrf.mxu0
        %v521 = vadd.f32 %v272, %v520
        %v522 = vpop.f32.mrf.mxu0
        %v523 = vpop.f32.mrf.mxu0
        %v524 = vadd.f32 %v272, %v523
        %v525 = vpop.f32.mrf.mxu0
        %526 = vmatprep.mubr.bf16.mxu0 0
        %527 = vmatmul.mubr.bf16.gmra.mxu0 %v336
        %v528 = vpop.f32.mrf.mxu0
        %v529 = vadd.f32 %v272, %v528
        %v530 = vpop.f32.mrf.mxu0
        %v531 = vpop.f32.mrf.mxu0
        %v532 = vpop.f32.mrf.mxu0
        %533 = vdwg.mxu0
        %v534 = vmax.f32 %v433, 0.0
        %v535 = vmax.f32 %v436, 0.0
        %v536 = vmax.f32 %v441, 0.0
        %v537 = vmax.f32 %v444, 0.0
        %v538 = vmax.f32 %v449, 0.0
        %v539 = vmax.f32 %v452, 0.0
        %v540 = vmax.f32 %v457, 0.0
        %v541 = vmax.f32 %v460, 0.0
        %v542 = vmax.f32 %v465, 0.0
        %v543 = vmax.f32 %v468, 0.0
        %v544 = vmax.f32 %v473, 0.0
        %v545 = vmax.f32 %v476, 0.0
        %v546 = vmax.f32 %v481, 0.0
        %v547 = vmax.f32 %v484, 0.0
        %v548 = vmax.f32 %v489, 0.0
        %v549 = vmax.f32 %v492, 0.0
        %v550 = vmax.f32 %v497, 0.0
        %v551 = vmax.f32 %v500, 0.0
        %v552 = vmax.f32 %v505, 0.0
        %v553 = vmax.f32 %v508, 0.0
        %v554 = vmax.f32 %v513, 0.0
        %v555 = vmax.f32 %v516, 0.0
        %v556 = vmax.f32 %v521, 0.0
        %v557 = vmax.f32 %v524, 0.0
        %v558 = vmax.f32 %v529, 0.0
        %s559 = smul.u32 %s26, 200
        %v560 = vlaneseq
        %v561 = vshrl.u32 %v560, 7
        %v562 = vadd.s32 %v561, 8
        %v563 = vadd.s32 %v561, 16
        %v564 = vadd.s32 %v561, 24
        %v565 = vadd.s32 %v561, 32
        %v566 = vadd.s32 %v561, 40
        %v567 = vadd.s32 %v561, 48
        %v568 = vadd.s32 %v561, 56
        %v569 = vadd.s32 %v561, 64
        %v570 = vadd.s32 %v561, 72
        %v571 = vadd.s32 %v561, 80
        %v572 = vadd.s32 %v561, 88
        %v573 = vadd.s32 %v561, 96
        %v574 = vadd.s32 %v561, 104
        %v575 = vadd.s32 %v561, 112
        %v576 = vadd.s32 %v561, 120
        %v577 = vadd.s32 %v561, 128
        %v578 = vadd.s32 %v561, 136
        %v579 = vadd.s32 %v561, 144
        %v580 = vadd.s32 %v561, 152
        %v581 = vadd.s32 %v561, 160
        %v582 = vadd.s32 %v561, 168
        %v583 = vadd.s32 %v561, 176
        %v584 = vadd.s32 %v561, 184
        %v585 = vadd.s32 %v561, 192
        %v586 = vstv %s559
        %v587 = vadd.s32 %v586, %v561
        %v588 = vadd.s32 %v586, %v562
        %v589 = vadd.s32 %v586, %v563
        %v590 = vadd.s32 %v586, %v564
        %v591 = vadd.s32 %v586, %v565
        %v592 = vadd.s32 %v586, %v566
        %v593 = vadd.s32 %v586, %v567
        %v594 = vadd.s32 %v586, %v568
        %v595 = vadd.s32 %v586, %v569
        %v596 = vadd.s32 %v586, %v570
        %v597 = vadd.s32 %v586, %v571
        %v598 = vadd.s32 %v586, %v572
        %v599 = vadd.s32 %v586, %v573
        %v600 = vadd.s32 %v586, %v574
        %v601 = vadd.s32 %v586, %v575
        %v602 = vadd.s32 %v586, %v576
        %v603 = vadd.s32 %v586, %v577
        %v604 = vadd.s32 %v586, %v578
        %v605 = vadd.s32 %v586, %v579
        %v606 = vadd.s32 %v586, %v580
        %v607 = vadd.s32 %v586, %v581
        %v608 = vadd.s32 %v586, %v582
        %v609 = vadd.s32 %v586, %v583
        %v610 = vadd.s32 %v586, %v584
        %v611 = vadd.s32 %v586, %v585
        %vm612 = vcmp.lt.s32.totalorder %v587, 196
        %vm613 = vcmp.lt.s32.totalorder %v588, 196
        %vm614 = vcmp.lt.s32.totalorder %v589, 196
        %vm615 = vcmp.lt.s32.totalorder %v590, 196
        %vm616 = vcmp.lt.s32.totalorder %v591, 196
        %vm617 = vcmp.lt.s32.totalorder %v592, 196
        %vm618 = vcmp.lt.s32.totalorder %v593, 196
        %vm619 = vcmp.lt.s32.totalorder %v594, 196
        %vm620 = vcmp.lt.s32.totalorder %v595, 196
        %vm621 = vcmp.lt.s32.totalorder %v596, 196
        %vm622 = vcmp.lt.s32.totalorder %v597, 196
        %vm623 = vcmp.lt.s32.totalorder %v598, 196
        %vm624 = vcmp.lt.s32.totalorder %v599, 196
        %vm625 = vcmp.lt.s32.totalorder %v600, 196
        %vm626 = vcmp.lt.s32.totalorder %v601, 196
        %vm627 = vcmp.lt.s32.totalorder %v602, 196
        %vm628 = vcmp.lt.s32.totalorder %v603, 196
        %vm629 = vcmp.lt.s32.totalorder %v604, 196
        %vm630 = vcmp.lt.s32.totalorder %v605, 196
        %vm631 = vcmp.lt.s32.totalorder %v606, 196
        %vm632 = vcmp.lt.s32.totalorder %v607, 196
        %vm633 = vcmp.lt.s32.totalorder %v608, 196
        %vm634 = vcmp.lt.s32.totalorder %v609, 196
        %vm635 = vcmp.lt.s32.totalorder %v610, 196
        %vm636 = vcmp.lt.s32.totalorder %v611, 196
        %v637 = vsel %vm612, 1, 0
        %v638 = vsel %vm613, 1, 0
        %v639 = vsel %vm614, 1, 0
        %v640 = vsel %vm615, 1, 0
        %v641 = vsel %vm616, 1, 0
        %v642 = vsel %vm617, 1, 0
        %v643 = vsel %vm618, 1, 0
        %v644 = vsel %vm619, 1, 0
        %v645 = vsel %vm620, 1, 0
        %v646 = vsel %vm621, 1, 0
        %v647 = vsel %vm622, 1, 0
        %v648 = vsel %vm623, 1, 0
        %v649 = vsel %vm624, 1, 0
        %v650 = vsel %vm625, 1, 0
        %v651 = vsel %vm626, 1, 0
        %v652 = vsel %vm627, 1, 0
        %v653 = vsel %vm628, 1, 0
        %v654 = vsel %vm629, 1, 0
        %v655 = vsel %vm630, 1, 0
        %v656 = vsel %vm631, 1, 0
        %v657 = vsel %vm632, 1, 0
        %v658 = vsel %vm633, 1, 0
        %v659 = vsel %vm634, 1, 0
        %v660 = vsel %vm635, 1, 0
        %v661 = vsel %vm636, 1, 0
        %vm662 = vcmp.eq.s32.totalorder %v637, 1
        %vm663 = vcmp.eq.s32.totalorder %v638, 1
        %vm664 = vcmp.eq.s32.totalorder %v639, 1
        %vm665 = vcmp.eq.s32.totalorder %v640, 1
        %vm666 = vcmp.eq.s32.totalorder %v641, 1
        %vm667 = vcmp.eq.s32.totalorder %v642, 1
        %vm668 = vcmp.eq.s32.totalorder %v643, 1
        %vm669 = vcmp.eq.s32.totalorder %v644, 1
        %vm670 = vcmp.eq.s32.totalorder %v645, 1
        %vm671 = vcmp.eq.s32.totalorder %v646, 1
        %vm672 = vcmp.eq.s32.totalorder %v647, 1
        %vm673 = vcmp.eq.s32.totalorder %v648, 1
        %vm674 = vcmp.eq.s32.totalorder %v649, 1
        %vm675 = vcmp.eq.s32.totalorder %v650, 1
        %vm676 = vcmp.eq.s32.totalorder %v651, 1
        %vm677 = vcmp.eq.s32.totalorder %v652, 1
        %vm678 = vcmp.eq.s32.totalorder %v653, 1
        %vm679 = vcmp.eq.s32.totalorder %v654, 1
        %vm680 = vcmp.eq.s32.totalorder %v655, 1
        %vm681 = vcmp.eq.s32.totalorder %v656, 1
        %vm682 = vcmp.eq.s32.totalorder %v657, 1
        %vm683 = vcmp.eq.s32.totalorder %v658, 1
        %vm684 = vcmp.eq.s32.totalorder %v659, 1
        %vm685 = vcmp.eq.s32.totalorder %v660, 1
        %vm686 = vcmp.eq.s32.totalorder %v661, 1
        %v687 = vsel %vm662, %v534, 0.0
        %v688 = vsel %vm663, %v535, 0.0
        %v689 = vsel %vm664, %v536, 0.0
        %v690 = vsel %vm665, %v537, 0.0
        %v691 = vsel %vm666, %v538, 0.0
        %v692 = vsel %vm667, %v539, 0.0
        %v693 = vsel %vm668, %v540, 0.0
        %v694 = vsel %vm669, %v541, 0.0
        %v695 = vsel %vm670, %v542, 0.0
        %v696 = vsel %vm671, %v543, 0.0
        %v697 = vsel %vm672, %v544, 0.0
        %v698 = vsel %vm673, %v545, 0.0
        %v699 = vsel %vm674, %v546, 0.0
        %v700 = vsel %vm675, %v547, 0.0
        %v701 = vsel %vm676, %v548, 0.0
        %v702 = vsel %vm677, %v549, 0.0
        %v703 = vsel %vm678, %v550, 0.0
        %v704 = vsel %vm679, %v551, 0.0
        %v705 = vsel %vm680, %v552, 0.0
        %v706 = vsel %vm681, %v553, 0.0
        %v707 = vsel %vm682, %v554, 0.0
        %v708 = vsel %vm683, %v555, 0.0
        %v709 = vsel %vm684, %v556, 0.0
        %v710 = vsel %vm685, %v557, 0.0
        %v711 = vsel %vm686, %v558, 0.0
        %v712 = vld [vmem:[#allocation2] sm:$0x1]
        %v713 = vadd.f32 %v687, %v688
        %v714 = vadd.f32 %v713, %v689
        %v715 = vadd.f32 %v714, %v690
        %v716 = vadd.f32 %v715, %v691
        %v717 = vadd.f32 %v716, %v692
        %v718 = vadd.f32 %v717, %v693
        %v719 = vadd.f32 %v718, %v694
        %v720 = vadd.f32 %v719, %v695
        %v721 = vadd.f32 %v720, %v696
        %v722 = vadd.f32 %v721, %v697
        %v723 = vadd.f32 %v722, %v698
        %v724 = vadd.f32 %v723, %v699
        %v725 = vadd.f32 %v724, %v700
        %v726 = vadd.f32 %v725, %v701
        %v727 = vadd.f32 %v726, %v702
        %v728 = vadd.f32 %v727, %v703
        %v729 = vadd.f32 %v728, %v704
        %v730 = vadd.f32 %v729, %v705
        %v731 = vadd.f32 %v730, %v706
        %v732 = vadd.f32 %v731, %v707
        %v733 = vadd.f32 %v732, %v708
        %v734 = vadd.f32 %v733, %v709
        %v735 = vadd.f32 %v734, %v710
        %v736 = vadd.f32 %v735, %v711
        %v737 = vrot.slane %v736, 4
        %v738 = vadd.f32 %v736, %v737
        %v739 = vrot.slane %v738, 2
        %v740 = vadd.f32 %v738, %v739
        %v741 = vrot.slane %v740, 1
        %v742 = vadd.f32 %v740, %v741
        %v743 = vadd.f32 %v712, %v742
        %744 = vst [vmem:[#allocation2] sm:$0x1] %v743
        // Predicated region
        $region45: #{tpu_custom_call.1} parent=31 // pred_check
          %p745 = pneg %p221
        $region46: #{tpu_custom_call.1} parent=31 // pred_check_branch
          %747 = sbr.rel (%p745) target = $region48
        $region47: #{tpu_custom_call.1} parent=31 // pred_region
          %v748 = vld [vmem:[#allocation2] sm:$0x1]
          %v749 = vmul.f32 %v748, 0.0051020407
          %750 = vst [vmem:[%s218] sm:$0x1] %v749
        $region48: #{tpu_custom_call.1} parent=31 // pred_fallthru
          _
        %s751 = sand.u32 %s111, 1
        %s752 = scalar_lea.sflag [#allocation5], %s751
        %s753 = sand.u32 %s111, 1
        %s754 = scalar_lea.vmem [#allocation8], %s753
        // Predicated region
        $region49: #{tpu_custom_call.1} parent=31 // pred_check
          %p755 = pneg %p121
        $region50: #{tpu_custom_call.1} parent=31 // pred_check_branch
          %757 = sbr.rel (%p755) target = $region52
        $region51: #{tpu_custom_call.1} parent=31 // pred_region
          %s759 = ssub.s32 16, 16
          %760 = vsyncadd %s752, %s759
          %s761 = smul.addr %s25, 16
          %s762 = scalar_lea.hbm %s3, %s761
          %s764 = sshll.u32 %s754, 4
          %s765 = int_to_ptr.vmem [resolvable:$true] %s764
          %767 = dma.vmem_to_hbm [thread:$0]  %s765, 16, %s762, %s752
        $region52: #{tpu_custom_call.1} parent=31 // pred_fallthru
          _
      $region32: #{tpu_custom_call.1} parent=5 // pred_fallthru
        _
      %p768 = scmp.le.s32.totalorder 2, %s16
      // Predicated region
      $region53: #{tpu_custom_call.1} parent=5 // pred_check
        %p769 = pneg %p768
      $region54: #{tpu_custom_call.1} parent=5 // pred_check_branch
        %771 = sbr.rel (%p769) target = $region56
      $region55: #{tpu_custom_call.1} parent=5 // pred_region
        %s772 = ssub.s32 %s16, 2
        // Predicated region
        $region57: #{tpu_custom_call.1} parent=55 // pred_check
          %p773 = pneg %p127
        $region58: #{tpu_custom_call.1} parent=55 // pred_check_branch
          %775 = sbr.rel (%p773) target = $region60
        $region59: #{tpu_custom_call.1} parent=55 // pred_region
          %s776 = sand.u32 %s112, 1
          %s777 = scalar_lea.sflag [#allocation5], %s776
          %s778 = sand.u32 %s112, 1
          %s779 = scalar_lea.vmem [#allocation8], %s778
          %780 = dma.done %s777, 16
        $region60: #{tpu_custom_call.1} parent=55 // pred_fallthru
          _
      $region56: #{tpu_custom_call.1} parent=5 // pred_fallthru
        _
    $region6: #{tpu_custom_call.1} parent=1 // loop_footer
      %s20 = sadd.s32 1, %s16
    $region7: #{tpu_custom_call.1} parent=1 // loop_footer_branch
      %15 = sbr.rel target = $region3
    $region8: #{tpu_custom_call.1} parent=1 // loop_exit
      _
    %781 = vsyncpa [#allocation4], 1
    %s782 = scalar_lea.sflag [#allocation4], 1
    %783 = vsyncpa %s782, 1
    %784 = vsyncpa [#allocation7], 1
    %785 = vsyncpa [#allocation5], 1
    %s786 = scalar_lea.sflag [#allocation5], 1
    %787 = vsyncpa %s786, 1

</llo_original>
